<compile_context>
chip_gen: v7x
topology: tpu7x:2x2x1
jax: 0.10.0
libtpu: 0.0.40
codegen_flags: <defaults>
</compile_context>

<pallas_src>
import functools

import jax
import jax.numpy as jnp
from jax import lax
from jax.experimental import pallas as pl
from jax.experimental.pallas import tpu as pltpu


def _layernorm_kernel(x_ref, w_ref, b_ref, o_ref, *, eps, hidden):
    # x_ref: (tile_rows, H); w_ref/b_ref: (1, H) f32; o_ref: (tile_rows, H)
    x = x_ref[...].astype(jnp.float32)
    inv_h = jnp.float32(1.0 / hidden)

    # Fused stats: one sweep yields sum(x) and sum(x*x).
    s1 = jnp.sum(x, axis=-1, keepdims=True)
    s2 = jnp.sum(x * x, axis=-1, keepdims=True)
    mean = s1 * inv_h
    var = jnp.maximum(s2 * inv_h - mean * mean, 0.0)      # guard rounding negatives

    y = (x - mean) * lax.rsqrt(var + jnp.float32(eps))    # eps inside sqrt (TF style)
    o_ref[...] = (w_ref[...] * y + b_ref[...]).astype(o_ref.dtype)


def _tpu_hw_info():
    """Best-effort (vmem_capacity_bytes, num_tensorcores_per_chip)."""
    vmem_cap = 128 * 1024 * 1024
    try:
        vmem_cap = int(pltpu.get_tpu_info().vmem_capacity_bytes)
    except Exception:
        pass
    kind = ""
    try:
        kind = str(getattr(jax.devices()[0], "device_kind", "")).lower()
    except Exception:
        pass
    num_tc = 1
    if "v7" in kind or "tpu7" in kind:
        num_tc = 2                       # v7x: 2 TensorCores per chip
    elif not kind and vmem_cap <= (64 << 20):
        num_tc = 2                       # 64 MiB VMEM/TC -> v7x-class heuristic
    return vmem_cap, num_tc


def _choose_tile_rows(rows, hidden, in_bytes, vmem_cap, num_tc):
    """Biggest aligned row tile that fits a generation-aware VMEM budget."""
    if in_bytes == 1:
        row_align = 32                   # int8/fp8 pack 32 rows per sublane group
    elif in_bytes == 2:
        row_align = 16                   # bf16/f16 pack two rows per sublane
    else:
        row_align = 8

    # Per-row VMEM: double-buffered input + double-buffered output (input dtype)
    # plus ~3 f32-sized temps (upcast x, centered, scaled).
    per_row = hidden * (4 * in_bytes + 12)
    budget_frac = 0.6 if vmem_cap <= (64 << 20) else 0.75
    budget = int(vmem_cap * budget_frac)

    max_rows_vmem = max(((budget // per_row) // row_align) * row_align, row_align)
    r_aligned = pl.cdiv(rows, row_align) * row_align

    tile_cap = 2048 if num_tc >= 2 else 1024      # v7x: per-step overhead amortizes better
    tile = min(tile_cap, max_rows_vmem, r_aligned)
    tile = max((tile // row_align) * row_align, row_align)

    if num_tc >= 2:
        # Megacore balance: prefer an even step count with >= 2 steps per TensorCore,
        # but only shrink the tile if that actually achieves it.
        steps = pl.cdiv(rows, tile)
        if steps < 2 * num_tc or steps % 2:
            target = max(steps, 2 * num_tc)
            target += target % 2
            cand = pl.cdiv(pl.cdiv(rows, target), row_align) * row_align
            cand = max(min(cand, max_rows_vmem, tile), row_align)
            cand_steps = pl.cdiv(rows, cand)
            if cand_steps >= 2 * num_tc and cand_steps % 2 == 0:
                tile = cand
    # On 1-TC chips (v5e/v6e) we deliberately do NOT force extra grid steps: the
    # single biggest VMEM-fitting tile minimizes per-step overhead for a mem-bound op.
    return tile, budget


def bert_layer_norm(x, weight, bias, eps=1e-12):
    """x: (..., hidden); weight, bias: (hidden,). Matches PyTorch BertLayerNorm."""
    orig_shape = x.shape
    H = orig_shape[-1]
    x2 = x.reshape(-1, H)
    R = x2.shape[0]

    in_bytes = jnp.dtype(x.dtype).itemsize
    vmem_cap, num_tc = _tpu_hw_info()
    tile_rows, vmem_budget = _choose_tile_rows(R, H, in_bytes, vmem_cap, num_tc)

    # Params cast to f32 once here (no per-step astype inside the kernel).
    w2 = weight.astype(jnp.float32).reshape(1, H)
    b2 = bias.astype(jnp.float32).reshape(1, H)

    kernel = functools.partial(_layernorm_kernel, eps=eps, hidden=H)

    cost = pl.CostEstimate(
        flops=int(6 * R * H),
        transcendentals=int(R),
        bytes_accessed=int(2 * R * H * in_bytes + 2 * H * 4),
    )

    out = pl.pallas_call(
        kernel,
        out_shape=jax.ShapeDtypeStruct((R, H), x.dtype),
        grid_spec=pltpu.PrefetchScalarGridSpec(
            num_scalar_prefetch=0,
            grid=(pl.cdiv(R, tile_rows),),           # ragged last block is masked
            in_specs=[
                # Last block dim == full array dim H, so no 128-padding is needed.
                pl.BlockSpec((tile_rows, H), lambda i: (i, 0)),
                pl.BlockSpec((1, H), lambda i: (0, 0)),   # params stay resident
                pl.BlockSpec((1, H), lambda i: (0, 0)),
            ],
            out_specs=pl.BlockSpec((tile_rows, H), lambda i: (i, 0)),
        ),
        compiler_params=pltpu.CompilerParams(
            dimension_semantics=("parallel",),
            vmem_limit_bytes=int(vmem_budget),
        ),
        cost_estimate=cost,
    )(x2, w2, b2)

    return out.reshape(orig_shape)


if __name__ == "__main__":
    key = jax.random.PRNGKey(0)
    B, S, H = 2, 8, 32
    x = jax.random.normal(key, (B, S, H), dtype=jnp.float32)

    # Matches nn.Parameter(torch.ones/zeros(hidden_size))
    weight = jnp.ones((H,), dtype=jnp.float32)
    bias = jnp.zeros((H,), dtype=jnp.float32)

    out = bert_layer_norm(x, weight, bias, eps=1e-12)
    out = jax.block_until_ready(out)

    # Reference check in plain JAX (same math as the PyTorch module).
    u = jnp.mean(x, axis=-1, keepdims=True)
    s = jnp.mean((x - u) ** 2, axis=-1, keepdims=True)
    ref = weight * ((x - u) / jnp.sqrt(s + 1e-12)) + bias
    assert jnp.allclose(out, ref, atol=1e-5, rtol=1e-5)

    # Ragged row count (R not a multiple of the row tile / alignment): lock in the
    # masked-boundary-block behavior flagged in the review.
    xr = jax.random.normal(jax.random.PRNGKey(1), (3, 5, H), dtype=jnp.float32)
    outr = jax.block_until_ready(bert_layer_norm(xr, weight, bias, eps=1e-12))
    ur = jnp.mean(xr, axis=-1, keepdims=True)
    sr = jnp.mean((xr - ur) ** 2, axis=-1, keepdims=True)
    refr = weight * ((xr - ur) / jnp.sqrt(sr + 1e-12)) + bias
    assert jnp.allclose(outr, refr, atol=1e-5, rtol=1e-5)

    print("KERNEL_OK")
</pallas_src>

<mosaic_0001>
module attributes {stable_mosaic.version = 11 : i64} {
  func.func @_layernorm_kernel(%arg0: i32, %arg1: memref<16x32xf32, #tpu.memory_space<vmem>>, %arg2: memref<1x32xf32, #tpu.memory_space<vmem>>, %arg3: memref<1x32xf32, #tpu.memory_space<vmem>>, %arg4: memref<16x32xf32, #tpu.memory_space<vmem>>) attributes {dimension_semantics = [#tpu.dimension_semantics<parallel>], iteration_bounds = array<i64: 1>, scalar_prefetch = 0 : i64, scratch_operands = 0 : i64, tpu.core_type = #tpu.core_type<tc>, window_params = [{transform_indices = @transform_0, window_bounds = array<i64: 16, 32>}, {pipeline_mode = #tpu.pipeline_mode<synchronous>, transform_indices = @transform_1, window_bounds = array<i64: 1, 32>}, {pipeline_mode = #tpu.pipeline_mode<synchronous>, transform_indices = @transform_2, window_bounds = array<i64: 1, 32>}, {transform_indices = @transform_3, window_bounds = array<i64: 16, 32>}]} {
    %c0 = arith.constant 0 : index
    %c0_0 = arith.constant 0 : index
    %0 = vector.load %arg1[%c0, %c0_0] : memref<16x32xf32, #tpu.memory_space<vmem>>, vector<16x32xf32>
    %cst = arith.constant dense<0.000000e+00> : vector<16xf32>
    %1 = vector.multi_reduction <add>, %0, %cst [1] : vector<16x32xf32> to vector<16xf32>
    %2 = vector.shape_cast %1 : vector<16xf32> to vector<16x1xf32>
    %3 = arith.mulf %0, %0 : vector<16x32xf32>
    %cst_1 = arith.constant dense<0.000000e+00> : vector<16xf32>
    %4 = vector.multi_reduction <add>, %3, %cst_1 [1] : vector<16x32xf32> to vector<16xf32>
    %5 = vector.shape_cast %4 : vector<16xf32> to vector<16x1xf32>
    %cst_2 = arith.constant 3.125000e-02 : f32
    %6 = vector.broadcast %cst_2 : f32 to vector<16x1xf32>
    %7 = arith.mulf %2, %6 : vector<16x1xf32>
    %cst_3 = arith.constant 3.125000e-02 : f32
    %8 = vector.broadcast %cst_3 : f32 to vector<16x1xf32>
    %9 = arith.mulf %5, %8 : vector<16x1xf32>
    %10 = arith.mulf %7, %7 : vector<16x1xf32>
    %11 = arith.subf %9, %10 : vector<16x1xf32>
    %cst_4 = arith.constant 0.000000e+00 : f32
    %12 = vector.broadcast %cst_4 : f32 to vector<16x1xf32>
    %13 = arith.maximumf %11, %12 : vector<16x1xf32>
    %14 = vector.broadcast %7 : vector<16x1xf32> to vector<16x32xf32>
    %15 = arith.subf %0, %14 : vector<16x32xf32>
    %cst_5 = arith.constant 9.99999996E-13 : f32
    %16 = vector.broadcast %cst_5 : f32 to vector<16x1xf32>
    %17 = arith.addf %13, %16 : vector<16x1xf32>
    %18 = math.rsqrt %17 : vector<16x1xf32>
    %19 = vector.broadcast %18 : vector<16x1xf32> to vector<16x32xf32>
    %20 = arith.mulf %15, %19 : vector<16x32xf32>
    %c0_6 = arith.constant 0 : index
    %c0_7 = arith.constant 0 : index
    %21 = vector.load %arg2[%c0_6, %c0_7] : memref<1x32xf32, #tpu.memory_space<vmem>>, vector<1x32xf32>
    %22 = vector.broadcast %21 : vector<1x32xf32> to vector<16x32xf32>
    %23 = arith.mulf %22, %20 : vector<16x32xf32>
    %c0_8 = arith.constant 0 : index
    %c0_9 = arith.constant 0 : index
    %24 = vector.load %arg3[%c0_8, %c0_9] : memref<1x32xf32, #tpu.memory_space<vmem>>, vector<1x32xf32>
    %25 = vector.broadcast %24 : vector<1x32xf32> to vector<16x32xf32>
    %26 = arith.addf %23, %25 : vector<16x32xf32>
    %c0_10 = arith.constant 0 : index
    %c0_11 = arith.constant 0 : index
    %27 = vector.load %arg4[%c0_10, %c0_11] : memref<16x32xf32, #tpu.memory_space<vmem>>, vector<16x32xf32>
    tpu.vector_store %arg4[%c0_10, %c0_11], %26 {strides = array<i32>} : memref<16x32xf32, #tpu.memory_space<vmem>>, vector<16x32xf32>,
    return
  }
  func.func @transform_0(%arg0: i32) -> (i32, i32) {
    %c0_i32 = arith.constant 0 : i32
    %c0_i32_0 = arith.constant 0 : i32
    return %arg0, %c0_i32 : i32, i32
  }
  func.func @transform_1(%arg0: i32) -> (i32, i32) {
    %c0_i32 = arith.constant 0 : i32
    %c0_i32_0 = arith.constant 0 : i32
    %c0_i32_1 = arith.constant 0 : i32
    return %c0_i32, %c0_i32_0 : i32, i32
  }
  func.func @transform_2(%arg0: i32) -> (i32, i32) {
    %c0_i32 = arith.constant 0 : i32
    %c0_i32_0 = arith.constant 0 : i32
    %c0_i32_1 = arith.constant 0 : i32
    return %c0_i32, %c0_i32_0 : i32, i32
  }
  func.func @transform_3(%arg0: i32) -> (i32, i32) {
    %c0_i32 = arith.constant 0 : i32
    %c0_i32_0 = arith.constant 0 : i32
    return %arg0, %c0_i32 : i32, i32
  }
}

</mosaic_0001>

<llo_original>
// kernel: tpu_custom_call.1
$region0: #{tpu_custom_call.1}
  #allocation0 [shape = 'u32[]', space=smem, size = 0x4, offset = 0x4, fixed_abs, tag = 'smem constant byte address 0x4 - core index']
  #allocation1 [shape = 'u32[144,128]{1,0:T(1,128)}', space=vmem, size = 0x12000, scoped, tag = 'internal scratch']
  %s0 = inlined_call_operand.hbm [shape: f32[16,32], index: 0, kind: input, shape index: {}]
  %s1 = inlined_call_operand.hbm [shape: f32[1,32], index: 1, kind: input, shape index: {}]
  %s2 = inlined_call_operand.hbm [shape: f32[1,32], index: 2, kind: input, shape index: {}]
  %s3 = inlined_call_operand.hbm [shape: f32[16,32], index: 3, kind: output, shape index: {}]
  %s4 = sld [smem:[#allocation0]]
  $region34: #{tpu_custom_call.1} parent=0
    _
  %s6 = ssub.s32 1, %s4
  %s7 = scalar_select 0, %s6, %s4
  $region1: #{tpu_custom_call.1} parent=0
    #allocation2 [shape = 'u8[8192]{0}', space=vmem, size = 0x2000, scoped, tag = 'input window, operand 0, single buffered']
    #allocation3 [shape = 's32[1]{0}', space=sflag, size = 0x4, scoped, tag = 'scoped memory for tpu_custom_call.1']
    #allocation4 [shape = 's32[1]{0}', space=sflag, size = 0x4, scoped, tag = 'scoped memory for tpu_custom_call.1']
    #allocation5 [shape = 'u8[512]{0}', space=vmem, size = 0x400, scoped, tag = 'input window, operand 1, single buffered']
    #allocation6 [shape = 's32[1]{0}', space=sflag, size = 0x4, scoped, tag = 'scoped memory for tpu_custom_call.1']
    #allocation7 [shape = 'u8[512]{0}', space=vmem, size = 0x400, scoped, tag = 'input window, operand 2, single buffered']
    #allocation8 [shape = 'u8[8192]{0}', space=vmem, size = 0x2000, scoped, tag = 'output window, operand 0, single buffered']
    %8 = vsyncpa [#allocation3], 0
    %9 = vsyncpa [#allocation6], 0
    %10 = vsyncpa [#allocation4], 0
    // Predicated region
    $region2: #{tpu_custom_call.1} parent=1 // pred_check
      _
    $region3: #{tpu_custom_call.1} parent=1 // pred_check_branch
      %12 = sbr.rel (0) target = $region5
    $region4: #{tpu_custom_call.1} parent=1 // pred_region
      %s14 = ssub.s32 256, 256
      %15 = vsyncadd [#allocation3], %s14
      %s16 = sshll.u32 [#allocation2], 4
      %s17 = int_to_ptr.vmem [resolvable:$true] %s16
      %22 = dma.hbm_to_vmem [thread:$0]  %s0, 256, %s17, [#allocation3], 128, 128, 8
    $region5: #{tpu_custom_call.1} parent=1 // pred_fallthru
      _
    // Predicated region
    $region6: #{tpu_custom_call.1} parent=1 // pred_check
      _
    $region7: #{tpu_custom_call.1} parent=1 // pred_check_branch
      %24 = sbr.rel (0) target = $region9
    $region8: #{tpu_custom_call.1} parent=1 // pred_region
      %s26 = ssub.s32 16, 16
      %27 = vsyncadd [#allocation6], %s26
      %s29 = sshll.u32 [#allocation5], 4
      %s30 = int_to_ptr.vmem [resolvable:$true] %s29
      %32 = dma.hbm_to_vmem [thread:$0]  %s1, 16, %s30, [#allocation6]
    $region9: #{tpu_custom_call.1} parent=1 // pred_fallthru
      _
    // Predicated region
    $region10: #{tpu_custom_call.1} parent=1 // pred_check
      _
    $region11: #{tpu_custom_call.1} parent=1 // pred_check_branch
      %34 = sbr.rel (0) target = $region13
    $region12: #{tpu_custom_call.1} parent=1 // pred_region
      %s36 = ssub.s32 16, 16
      %37 = vsyncadd [#allocation6], %s36
      %s39 = sshll.u32 [#allocation7], 4
      %s40 = int_to_ptr.vmem [resolvable:$true] %s39
      %42 = dma.hbm_to_vmem [thread:$0]  %s2, 16, %s40, [#allocation6]
    $region13: #{tpu_custom_call.1} parent=1 // pred_fallthru
      _
    // Predicated region
    $region14: #{tpu_custom_call.1} parent=1 // pred_check
      _
    $region15: #{tpu_custom_call.1} parent=1 // pred_check_branch
      %44 = sbr.rel (0) target = $region17
    $region16: #{tpu_custom_call.1} parent=1 // pred_region
      %45 = dma.done [#allocation3], 256
    $region17: #{tpu_custom_call.1} parent=1 // pred_fallthru
      _
    // Predicated region
    $region18: #{tpu_custom_call.1} parent=1 // pred_check
      _
    $region19: #{tpu_custom_call.1} parent=1 // pred_check_branch
      %47 = sbr.rel (0) target = $region21
    $region20: #{tpu_custom_call.1} parent=1 // pred_region
      %48 = dma.done [#allocation6], 16
    $region21: #{tpu_custom_call.1} parent=1 // pred_fallthru
      _
    // Predicated region
    $region22: #{tpu_custom_call.1} parent=1 // pred_check
      _
    $region23: #{tpu_custom_call.1} parent=1 // pred_check_branch
      %50 = sbr.rel (0) target = $region25
    $region24: #{tpu_custom_call.1} parent=1 // pred_region
      %51 = dma.done [#allocation6], 16
    $region25: #{tpu_custom_call.1} parent=1 // pred_fallthru
      _
    %v52 = vld [vmem:[#allocation2] sm:$0xff]
    %v53 = vld [vmem:[#allocation2 + $0x8] sm:$0xff]
    %vm54 = vcmask 261120
    %v55 = vsel %vm54, %v52, 0.0
    %56 = vadd.xlane.f32.xlu0 %v55
    %v57 = vpop.xlane.xlu0 %56
    %v58 = vsel %vm54, %v53, 0.0
    %59 = vadd.xlane.f32.xlu0 %v58
    %v60 = vpop.xlane.xlu0 %59
    %v61 = vmul.f32 %v52, %v52
    %v62 = vmul.f32 %v53, %v53
    %v63 = vsel %vm54, %v61, 0.0
    %64 = vadd.xlane.f32.xlu0 %v63
    %v65 = vpop.xlane.xlu0 %64
    %v66 = vsel %vm54, %v62, 0.0
    %67 = vadd.xlane.f32.xlu0 %v66
    %v68 = vpop.xlane.xlu0 %67
    %v69 = vmul.f32 %v57, 0.03125
    %v70 = vmul.f32 %v60, 0.03125
    %v71 = vmul.f32 %v65, 0.03125
    %v72 = vmul.f32 %v68, 0.03125
    %v73 = vmul.f32 %v69, %v69
    %v74 = vmul.f32 %v70, %v70
    %v75 = vsub.f32 %v71, %v73
    %v76 = vsub.f32 %v72, %v74
    %v77 = vmax.f32 %v75, 0.0
    %v78 = vmax.f32 %v76, 0.0
    %v79 = vsub.f32 %v52, %v69
    %v80 = vsub.f32 %v53, %v70
    %v81 = vadd.f32 %v77, 1e-12
    %v82 = vadd.f32 %v78, 1e-12
    %v83 = vrsqrt.pop %v81
    %v84 = vrsqrt.pop %v82
    %v85 = vmul.f32 %v79, %v83
    %v86 = vmul.f32 %v80, %v84
    %v87 = vld [vmem:[#allocation5] sm:$0x1]
    %v89 = vlaneseq
    %v90 = vshrl.u32 %v89, 7
    %v91 = vsub.s32 0, %v90
    %v92 = vrot.slane %v87, %v91
    %v94 = vmul.f32 %v92, %v85
    %v95 = vmul.f32 %v92, %v86
    %v96 = vld [vmem:[#allocation7] sm:$0x1]
    %v98 = vlaneseq
    %v99 = vshrl.u32 %v98, 7
    %v100 = vsub.s32 0, %v99
    %v101 = vrot.slane %v96, %v100
    %v103 = vadd.f32 %v94, %v101
    %v104 = vadd.f32 %v95, %v101
    %105 = vst.msk [vmem:[#allocation8] sm:$0xff] %vm54, %v103
    %106 = vst.msk [vmem:[#allocation8 + $0x8] sm:$0xff] %vm54, %v104
    // Predicated region
    $region26: #{tpu_custom_call.1} parent=1 // pred_check
      _
    $region27: #{tpu_custom_call.1} parent=1 // pred_check_branch
      %108 = sbr.rel (0) target = $region29
    $region28: #{tpu_custom_call.1} parent=1 // pred_region
      %s110 = ssub.s32 256, 256
      %111 = vsyncadd [#allocation4], %s110
      %s112 = sshll.u32 [#allocation8], 4
      %s113 = int_to_ptr.vmem [resolvable:$true] %s112
      %118 = dma.vmem_to_hbm [thread:$0]  %s113, 256, %s3, [#allocation4], 128, 128, 8
    $region29: #{tpu_custom_call.1} parent=1 // pred_fallthru
      _
    // Predicated region
    $region30: #{tpu_custom_call.1} parent=1 // pred_check
      _
    $region31: #{tpu_custom_call.1} parent=1 // pred_check_branch
      %120 = sbr.rel (0) target = $region33
    $region32: #{tpu_custom_call.1} parent=1 // pred_region
      %121 = dma.done [#allocation4], 256
    $region33: #{tpu_custom_call.1} parent=1 // pred_fallthru
      _
    %122 = vsyncpa [#allocation3], 1
    %123 = vsyncpa [#allocation6], 1
    %124 = vsyncpa [#allocation4], 1

</llo_original>
